<compile_context>
chip_gen: v7x
topology: tpu7x:2x2x1
jax: 0.10.0
libtpu: 0.0.40
codegen_flags: <defaults>
</compile_context>

<pallas_src>
import functools

import jax
import jax.numpy as jnp
from jax.experimental import pallas as pl
from jax.experimental.pallas import tpu as pltpu


LANES = 128            # vreg lane width (last dim)
ROW_ALIGN = 16         # sublane alignment safe for both f32 (8) and bf16 (16)
MAX_TILE_ROWS = 4096   # 4096 x 128 x 4 B = 2 MiB per f32 input block


def _round_up(x, m):
    return ((x + m - 1) // m) * m


def _num_parts():
    """2 leading-grid parts on v7x (2 TensorCores/chip), 1 on v5e/v6e."""
    try:
        kind = jax.devices()[0].device_kind.lower()
    except Exception:
        return 1
    return 2 if "v7" in kind else 1


def _custom_l1_kernel(out_ref, tgt_ref, o_ref, acc_ref, *, c0, c1, beta):
    """Accumulate sum(|out - tgt| * w) into a resident VMEM accumulator.

    On the last reduction step the (tile_rows, 128) accumulator is folded along
    rows to one (8, 128) block and written out (4 KiB of HBM writeback/part).
    """
    t = pl.program_id(1)

    @pl.when(t == 0)
    def _init():
        acc_ref[...] = jnp.zeros_like(acc_ref)

    o = out_ref[...].astype(jnp.float32)        # (tile_rows, 128)
    g = tgt_ref[...].astype(jnp.float32)
    # weights = max(0.1, 1 - (o*std + mean)/78)**beta  ==  max(0.1, c0 - o*c1)**beta
    base = jnp.maximum(0.1, c0 - o * c1)
    w = base if beta == 1 else base ** beta     # static int power -> multiply chain
    acc_ref[...] += jnp.abs(o - g) * w

    @pl.when(t == pl.num_programs(1) - 1)
    def _finish():
        tr, ln = acc_ref.shape
        # (tile_rows,128) -> (tile_rows//8, 8, 128) keeps the (8,128) tile
        # layout (free reshape); the axis-0 sum is plain vreg adds.
        o_ref[...] = acc_ref[...].reshape(tr // 8, 8, ln).sum(axis=0)


def custom_l1_loss(output, target, *, std_y, mean_y, beta=1,
                   num_parts=None, max_tile_rows=MAX_TILE_ROWS):
    """output, target: same shape, float dtype. Returns scalar mean weighted-L1 loss."""
    assert output.shape == target.shape
    # beta must be a static Python int: a traced/float beta would break the
    # beta==1 branch and lower '**' to exp/log on the EUP.
    assert isinstance(beta, int) and beta >= 1, "beta must be a static Python int >= 1"

    o = output.reshape(-1)                      # keep native dtype (no astype copy)
    g = target.reshape(-1)
    n = o.shape[0]
    if num_parts is None:
        num_parts = _num_parts()

    # Split rows across parts first, then round only to sublane granularity.
    rows = pl.cdiv(n, LANES)
    rows_per_part = _round_up(pl.cdiv(rows, num_parts), ROW_ALIGN)
    tiles_per_part = pl.cdiv(rows_per_part, max_tile_rows)
    tile_rows = _round_up(pl.cdiv(rows_per_part, tiles_per_part), ROW_ALIGN)
    rows_per_part = tiles_per_part * tile_rows
    total_rows = num_parts * rows_per_part
    total = total_rows * LANES

    # Zero padding contributes exactly 0 to the sum (|0 - 0| * w == 0).
    pad = total - n
    if pad:
        o = jnp.pad(o, (0, pad))
        g = jnp.pad(g, (0, pad))
    o = o.reshape(total_rows, LANES)
    g = g.reshape(total_rows, LANES)

    c1 = float(std_y) / 78.0
    c0 = 1.0 - float(mean_y) / 78.0
    kernel = functools.partial(_custom_l1_kernel, c0=c0, c1=c1, beta=beta)

    row_map = lambda p, t, tpp=tiles_per_part: (p * tpp + t, 0)

    bytes_accessed = int(o.size * o.dtype.itemsize + g.size * g.dtype.itemsize
                         + num_parts * 8 * LANES * 4)
    flops = int((7 + (beta - 1)) * total)

    partial = pl.pallas_call(
        kernel,
        out_shape=jax.ShapeDtypeStruct((num_parts * 8, LANES), jnp.float32),
        grid_spec=pltpu.PrefetchScalarGridSpec(
            num_scalar_prefetch=0,
            grid=(num_parts, tiles_per_part),
            in_specs=[
                pl.BlockSpec((tile_rows, LANES), row_map),
                pl.BlockSpec((tile_rows, LANES), row_map),
            ],
            out_specs=pl.BlockSpec((8, LANES), lambda p, t: (p, 0)),
            scratch_shapes=[pltpu.VMEM((tile_rows, LANES), jnp.float32)],
        ),
        compiler_params=pltpu.CompilerParams(
            # On v7x the size-2 leading axis shards the stream over both TCs;
            # elsewhere num_parts == 1 so it is a no-op.
            dimension_semantics=("parallel", "arbitrary"),
        ),
        cost_estimate=pl.CostEstimate(flops=flops, transcendentals=0,
                                      bytes_accessed=bytes_accessed),
    )(o, g)

    # Tiny (num_parts*8, 128) reduction + divide by the true N in XLA.
    return jnp.sum(partial) / n


def custom_l1_loss_ref(output, target, std_y, mean_y, beta=1):
    o = output.astype(jnp.float32)
    g = target.astype(jnp.float32)
    unnorm = o * std_y + mean_y
    w = jnp.maximum(0.1, 1.0 - unnorm / 78.0) ** beta
    return jnp.mean(jnp.abs(o - g) * w)


if __name__ == "__main__":
    key = jax.random.PRNGKey(0)
    k1, k2, k3, k4, k5, k6 = jax.random.split(key, 6)

    STD_Y, MEAN_Y = 10.0, 30.0   # dic_norm['std']['Y'], dic_norm['mean']['Y']

    # --- case 1: (64, 1) normalized distances, beta = 1 ---
    out1 = jax.random.normal(k1, (64, 1), dtype=jnp.float32)
    tgt1 = jax.random.normal(k2, (64, 1), dtype=jnp.float32)
    loss1 = jax.block_until_ready(
        custom_l1_loss(out1, tgt1, std_y=STD_Y, mean_y=MEAN_Y, beta=1))
    ref1 = custom_l1_loss_ref(out1, tgt1, STD_Y, MEAN_Y, beta=1)
    assert jnp.allclose(loss1, ref1, rtol=1e-5, atol=1e-5), (loss1, ref1)

    # --- case 2: ragged N = 300, beta = 2 (padding + static power path) ---
    out2 = jax.random.normal(k3, (300, 1), dtype=jnp.float32)
    tgt2 = jax.random.normal(k4, (300, 1), dtype=jnp.float32)
    loss2 = jax.block_until_ready(
        custom_l1_loss(out2, tgt2, std_y=STD_Y, mean_y=MEAN_Y, beta=2))
    ref2 = custom_l1_loss_ref(out2, tgt2, STD_Y, MEAN_Y, beta=2)
    assert jnp.allclose(loss2, ref2, rtol=1e-5, atol=1e-5), (loss2, ref2)

    # --- case 3: bf16 inputs, forced 2 parts + multiple reduction steps ---
    # (exercises the native-dtype upcast, the multi-step accumulator and the
    #  per-part epilogue regardless of which TPU generation this runs on)
    out3 = jax.random.normal(k5, (5000, 1), dtype=jnp.bfloat16)
    tgt3 = jax.random.normal(k6, (5000, 1), dtype=jnp.bfloat16)
    loss3 = jax.block_until_ready(
        custom_l1_loss(out3, tgt3, std_y=STD_Y, mean_y=MEAN_Y, beta=1,
                       num_parts=2, max_tile_rows=16))
    ref3 = custom_l1_loss_ref(out3, tgt3, STD_Y, MEAN_Y, beta=1)
    assert jnp.allclose(loss3, ref3, rtol=1e-3, atol=1e-3), (loss3, ref3)

    print("KERNEL_OK")
</pallas_src>

<mosaic_0001>
module attributes {stable_mosaic.version = 11 : i64} {
  func.func @_custom_l1_kernel(%arg0: i32, %arg1: i32, %arg2: memref<16x128xf32, #tpu.memory_space<vmem>>, %arg3: memref<16x128xf32, #tpu.memory_space<vmem>>, %arg4: memref<8x128xf32, #tpu.memory_space<vmem>>, %arg5: memref<16x128xf32, #tpu.memory_space<vmem>>) attributes {dimension_semantics = [#tpu.dimension_semantics<parallel>, #tpu.dimension_semantics<arbitrary>], iteration_bounds = array<i64: 1, 1>, scalar_prefetch = 0 : i64, scratch_operands = 1 : i64, tpu.core_type = #tpu.core_type<tc>, window_params = [{transform_indices = @transform_0, window_bounds = array<i64: 16, 128>}, {transform_indices = @transform_1, window_bounds = array<i64: 16, 128>}, {transform_indices = @transform_2, window_bounds = array<i64: 8, 128>}]} {
    %c0_i32 = arith.constant 0 : i32
    %0 = arith.cmpi eq, %arg1, %c0_i32 : i32
    %1 = arith.extui %0 : i1 to i32
    %c0_i32_0 = arith.constant 0 : i32
    %2 = arith.cmpi ne, %1, %c0_i32_0 : i32
    scf.if %2 {
      %cst_12 = arith.constant 0.000000e+00 : f32
      %20 = vector.broadcast %cst_12 : f32 to vector<16x128xf32>
      %c0_13 = arith.constant 0 : index
      %c0_14 = arith.constant 0 : index
      %21 = vector.load %arg5[%c0_13, %c0_14] : memref<16x128xf32, #tpu.memory_space<vmem>>, vector<16x128xf32>
      tpu.vector_store %arg5[%c0_13, %c0_14], %20 {strides = array<i32>} : memref<16x128xf32, #tpu.memory_space<vmem>>, vector<16x128xf32>,
    } else {
    }
    %c0 = arith.constant 0 : index
    %c0_1 = arith.constant 0 : index
    %3 = vector.load %arg2[%c0, %c0_1] : memref<16x128xf32, #tpu.memory_space<vmem>>, vector<16x128xf32>
    %c0_2 = arith.constant 0 : index
    %c0_3 = arith.constant 0 : index
    %4 = vector.load %arg3[%c0_2, %c0_3] : memref<16x128xf32, #tpu.memory_space<vmem>>, vector<16x128xf32>
    %cst = arith.constant 0.128205135 : f32
    %5 = vector.broadcast %cst : f32 to vector<16x128xf32>
    %6 = arith.mulf %3, %5 : vector<16x128xf32>
    %cst_4 = arith.constant 0.615384638 : f32
    %7 = vector.broadcast %cst_4 : f32 to vector<16x128xf32>
    %8 = arith.subf %7, %6 : vector<16x128xf32>
    %cst_5 = arith.constant 1.000000e-01 : f32
    %9 = vector.broadcast %cst_5 : f32 to vector<16x128xf32>
    %10 = arith.maximumf %9, %8 : vector<16x128xf32>
    %c0_6 = arith.constant 0 : index
    %c0_7 = arith.constant 0 : index
    %11 = vector.load %arg5[%c0_6, %c0_7] : memref<16x128xf32, #tpu.memory_space<vmem>>, vector<16x128xf32>
    %12 = arith.subf %3, %4 : vector<16x128xf32>
    %13 = math.absf %12 : vector<16x128xf32>
    %14 = arith.mulf %13, %10 : vector<16x128xf32>
    %15 = arith.addf %11, %14 : vector<16x128xf32>
    %c0_8 = arith.constant 0 : index
    %c0_9 = arith.constant 0 : index
    %16 = vector.load %arg5[%c0_8, %c0_9] : memref<16x128xf32, #tpu.memory_space<vmem>>, vector<16x128xf32>
    tpu.vector_store %arg5[%c0_8, %c0_9], %15 {strides = array<i32>} : memref<16x128xf32, #tpu.memory_space<vmem>>, vector<16x128xf32>,
    %c0_i32_10 = arith.constant 0 : i32
    %17 = arith.cmpi eq, %arg1, %c0_i32_10 : i32
    %18 = arith.extui %17 : i1 to i32
    %c0_i32_11 = arith.constant 0 : i32
    %19 = arith.cmpi ne, %18, %c0_i32_11 : i32
    scf.if %19 {
      %c0_12 = arith.constant 0 : index
      %c0_13 = arith.constant 0 : index
      %20 = vector.load %arg5[%c0_12, %c0_13] : memref<16x128xf32, #tpu.memory_space<vmem>>, vector<16x128xf32>
      %21 = vector.shape_cast %20 : vector<16x128xf32> to vector<2x8x128xf32>
      %cst_14 = arith.constant dense<0.000000e+00> : vector<8x128xf32>
      %22 = vector.multi_reduction <add>, %21, %cst_14 [0] : vector<2x8x128xf32> to vector<8x128xf32>
      %c0_15 = arith.constant 0 : index
      %c0_16 = arith.constant 0 : index
      %23 = vector.load %arg4[%c0_15, %c0_16] : memref<8x128xf32, #tpu.memory_space<vmem>>, vector<8x128xf32>
      tpu.vector_store %arg4[%c0_15, %c0_16], %22 {strides = array<i32>} : memref<8x128xf32, #tpu.memory_space<vmem>>, vector<8x128xf32>,
    } else {
    }
    return
  }
  func.func @transform_0(%arg0: i32, %arg1: i32) -> (i32, i32) {
    %c1_i32 = arith.constant 1 : i32
    %0 = arith.muli %arg0, %c1_i32 : i32
    %1 = arith.addi %0, %arg1 : i32
    %c0_i32 = arith.constant 0 : i32
    %c0_i32_0 = arith.constant 0 : i32
    return %1, %c0_i32 : i32, i32
  }
  func.func @transform_1(%arg0: i32, %arg1: i32) -> (i32, i32) {
    %c1_i32 = arith.constant 1 : i32
    %0 = arith.muli %arg0, %c1_i32 : i32
    %1 = arith.addi %0, %arg1 : i32
    %c0_i32 = arith.constant 0 : i32
    %c0_i32_0 = arith.constant 0 : i32
    return %1, %c0_i32 : i32, i32
  }
  func.func @transform_2(%arg0: i32, %arg1: i32) -> (i32, i32) {
    %c0_i32 = arith.constant 0 : i32
    %c0_i32_0 = arith.constant 0 : i32
    return %arg0, %c0_i32 : i32, i32
  }
}

</mosaic_0001>

<llo_original>
// kernel: tpu_custom_call.1
$region0: #{tpu_custom_call.1}
  #allocation0 [shape = 'u32[]', space=smem, size = 0x4, offset = 0x4, fixed_abs, tag = 'smem constant byte address 0x4 - core index']
  #allocation1 [shape = 'u32[144,128]{1,0:T(1,128)}', space=vmem, size = 0x12000, scoped, tag = 'internal scratch']
  #allocation2 [shape = 'f32[16,128]{1,0:T(8,128)}', space=vmem, size = 0x2000, scoped, tag = 'scratch operand']
  %s0 = inlined_call_operand.hbm [shape: f32[16,128], index: 0, kind: input, shape index: {}]
  %s1 = inlined_call_operand.hbm [shape: f32[16,128], index: 1, kind: input, shape index: {}]
  %s2 = inlined_call_operand.hbm [shape: f32[8,128], index: 2, kind: output, shape index: {}]
  %s3 = sld [smem:[#allocation0]]
  $region34: #{tpu_custom_call.1} parent=0
    _
  %s5 = ssub.s32 1, %s3
  %s6 = scalar_select 0, %s5, %s3
  $region1: #{tpu_custom_call.1} parent=0
    #allocation3 [shape = 'u8[8192]{0}', space=vmem, size = 0x2000, scoped, tag = 'input window, operand 0, single buffered']
    #allocation4 [shape = 's32[1]{0}', space=sflag, size = 0x4, scoped, tag = 'scoped memory for tpu_custom_call.1']
    #allocation5 [shape = 's32[1]{0}', space=sflag, size = 0x4, scoped, tag = 'scoped memory for tpu_custom_call.1']
    #allocation6 [shape = 'u8[8192]{0}', space=vmem, size = 0x2000, scoped, tag = 'input window, operand 1, single buffered']
    #allocation7 [shape = 's32[1]{0}', space=sflag, size = 0x4, scoped, tag = 'scoped memory for tpu_custom_call.1']
    #allocation8 [shape = 'u8[4096]{0}', space=vmem, size = 0x1000, scoped, tag = 'output window, operand 0, single buffered']
    %7 = vsyncpa [#allocation4], 0
    %8 = vsyncpa [#allocation7], 0
    %9 = vsyncpa [#allocation5], 0
    // Predicated region
    $region2: #{tpu_custom_call.1} parent=1 // pred_check
      _
    $region3: #{tpu_custom_call.1} parent=1 // pred_check_branch
      %11 = sbr.rel (0) target = $region5
    $region4: #{tpu_custom_call.1} parent=1 // pred_region
      %s12 = sadd.s32 0, 0
      %s13 = smul.u32 2, %s12
      %s15 = ssub.s32 256, 256
      %16 = vsyncadd [#allocation4], %s15
      %s17 = smul.addr %s13, 128
      %s18 = scalar_lea.hbm %s0, %s17
      %s19 = sshll.u32 [#allocation3], 4
      %s20 = int_to_ptr.vmem [resolvable:$true] %s19
      %25 = dma.hbm_to_vmem [thread:$0]  %s18, 256, %s20, [#allocation4], 128, 128, 8
    $region5: #{tpu_custom_call.1} parent=1 // pred_fallthru
      _
    // Predicated region
    $region6: #{tpu_custom_call.1} parent=1 // pred_check
      _
    $region7: #{tpu_custom_call.1} parent=1 // pred_check_branch
      %27 = sbr.rel (0) target = $region9
    $region8: #{tpu_custom_call.1} parent=1 // pred_region
      %s28 = sadd.s32 0, 0
      %s29 = smul.u32 2, %s28
      %s31 = ssub.s32 256, 256
      %32 = vsyncadd [#allocation7], %s31
      %s33 = smul.addr %s29, 128
      %s34 = scalar_lea.hbm %s1, %s33
      %s35 = sshll.u32 [#allocation6], 4
      %s36 = int_to_ptr.vmem [resolvable:$true] %s35
      %41 = dma.hbm_to_vmem [thread:$0]  %s34, 256, %s36, [#allocation7], 128, 128, 8
    $region9: #{tpu_custom_call.1} parent=1 // pred_fallthru
      _
    // Predicated region
    $region10: #{tpu_custom_call.1} parent=1 // pred_check
      _
    $region11: #{tpu_custom_call.1} parent=1 // pred_check_branch
      %43 = sbr.rel (0) target = $region13
    $region12: #{tpu_custom_call.1} parent=1 // pred_region
      %44 = dma.done [#allocation4], 256
    $region13: #{tpu_custom_call.1} parent=1 // pred_fallthru
      _
    // Predicated region
    $region14: #{tpu_custom_call.1} parent=1 // pred_check
      _
    $region15: #{tpu_custom_call.1} parent=1 // pred_check_branch
      %46 = sbr.rel (0) target = $region17
    $region16: #{tpu_custom_call.1} parent=1 // pred_region
      %47 = dma.done [#allocation7], 256
    $region17: #{tpu_custom_call.1} parent=1 // pred_fallthru
      _
    %s48 = sadd.s32 0, 0
    %s49 = smul.u32 2, %s48
    %s50 = sadd.s32 0, 0
    %s51 = smul.u32 2, %s50
    %p52 = scmp.eq.s32.totalorder 0, 0
    // Predicated region
    $region18: #{tpu_custom_call.1} parent=1 // pred_check
      %p53 = pneg %p52
    $region19: #{tpu_custom_call.1} parent=1 // pred_check_branch
      %55 = sbr.rel (%p53) target = $region21
    $region20: #{tpu_custom_call.1} parent=1 // pred_region
      %56 = vst [vmem:[#allocation2] sm:$0xff] 0.0
      %57 = vst [vmem:[#allocation2 + $0x8] sm:$0xff] 0.0
    $region21: #{tpu_custom_call.1} parent=1 // pred_fallthru
      _
    %v58 = vld [vmem:[#allocation3] sm:$0xff]
    %v59 = vld [vmem:[#allocation3 + $0x8] sm:$0xff]
    %v60 = vld [vmem:[#allocation6] sm:$0xff]
    %v61 = vld [vmem:[#allocation6 + $0x8] sm:$0xff]
    %v62 = vmul.f32 %v58, 0.12820514
    %v63 = vmul.f32 %v59, 0.12820514
    %v64 = vsub.f32 0.61538464, %v62
    %v65 = vsub.f32 0.61538464, %v63
    %v66 = vmax.f32 %v64, 0.1
    %v67 = vmax.f32 %v65, 0.1
    %v68 = vld [vmem:[#allocation2] sm:$0xff]
    %v69 = vld [vmem:[#allocation2 + $0x8] sm:$0xff]
    %v70 = vsub.f32 %v58, %v60
    %v71 = vsub.f32 %v59, %v61
    %v72 = vand.u32 2147483647, %v70
    %v73 = vand.u32 2147483647, %v71
    %v74 = vmul.f32 %v72, %v66
    %v75 = vmul.f32 %v73, %v67
    %v76 = vadd.f32 %v68, %v74
    %v77 = vadd.f32 %v69, %v75
    %78 = vst [vmem:[#allocation2] sm:$0xff] %v76
    %79 = vst [vmem:[#allocation2 + $0x8] sm:$0xff] %v77
    // Predicated region
    $region22: #{tpu_custom_call.1} parent=1 // pred_check
      %p80 = pneg %p52
    $region23: #{tpu_custom_call.1} parent=1 // pred_check_branch
      %82 = sbr.rel (%p80) target = $region25
    $region24: #{tpu_custom_call.1} parent=1 // pred_region
      %v83 = vld [vmem:[#allocation2] sm:$0xff]
      %v84 = vld [vmem:[#allocation2 + $0x8] sm:$0xff]
      %v85 = vadd.f32 %v83, %v84
      %86 = vst [vmem:[#allocation8] sm:$0xff] %v85
    $region25: #{tpu_custom_call.1} parent=1 // pred_fallthru
      _
    // Predicated region
    $region26: #{tpu_custom_call.1} parent=1 // pred_check
      _
    $region27: #{tpu_custom_call.1} parent=1 // pred_check_branch
      %88 = sbr.rel (0) target = $region29
    $region28: #{tpu_custom_call.1} parent=1 // pred_region
      %s90 = ssub.s32 128, 128
      %91 = vsyncadd [#allocation5], %s90
      %s93 = sshll.u32 [#allocation8], 4
      %s94 = int_to_ptr.vmem [resolvable:$true] %s93
      %96 = dma.vmem_to_hbm [thread:$0]  %s94, 128, %s2, [#allocation5]
    $region29: #{tpu_custom_call.1} parent=1 // pred_fallthru
      _
    // Predicated region
    $region30: #{tpu_custom_call.1} parent=1 // pred_check
      _
    $region31: #{tpu_custom_call.1} parent=1 // pred_check_branch
      %98 = sbr.rel (0) target = $region33
    $region32: #{tpu_custom_call.1} parent=1 // pred_region
      %99 = dma.done [#allocation5], 128
    $region33: #{tpu_custom_call.1} parent=1 // pred_fallthru
      _
    %100 = vsyncpa [#allocation4], 1
    %101 = vsyncpa [#allocation7], 1
    %102 = vsyncpa [#allocation5], 1

</llo_original>
